<compile_context>
chip_gen: v5e
topology: v5e:2x2
jax: 0.10.0
libtpu: 0.0.40
codegen_flags: <defaults>
</compile_context>

<pallas_src>
import functools

import jax
import jax.numpy as jnp
from jax.experimental import pallas as pl
from jax.experimental.pallas import tpu as pltpu


def _label_smoothing_kernel(x_ref, t_ref, out_ref, *, confidence, smoothing,
                            n_valid, tile_n, n_classes, chunks):
    """x_ref: (TN, C) logits (native dtype); t_ref: (TN, 1) int32 targets."""
    i = pl.program_id(0)
    t = t_ref[...]                                               # (TN, 1) int32

    m = None        # running row max                       (TN, 1) f32
    sexp = None     # running sum(exp(x - m))                (TN, 1) f32
    sx = None       # running sum(x)                         (TN, 1) f32
    xt = None       # running one-hot gather x[row, t[row]]  (TN, 1) f32

    # Single streaming pass over the class axis in static lane chunks; the
    # f32 cast fuses per chunk instead of materializing a (TN, C) f32 copy.
    for (start, size) in chunks:
        xc = x_ref[:, pl.ds(start, size)].astype(jnp.float32)   # (TN, size)
        cmax = jnp.max(xc, axis=-1, keepdims=True)
        col = jax.lax.broadcasted_iota(jnp.int32, xc.shape, 1) + start
        hit = jnp.sum(jnp.where(col == t, xc, 0.0), axis=-1, keepdims=True)
        csum = jnp.sum(xc, axis=-1, keepdims=True)
        if m is None:
            m = cmax
            sexp = jnp.sum(jnp.exp(xc - m), axis=-1, keepdims=True)
            sx = csum
            xt = hit
        else:
            m_new = jnp.maximum(m, cmax)
            sexp = (jnp.exp(m - m_new) * sexp
                    + jnp.sum(jnp.exp(xc - m_new), axis=-1, keepdims=True))
            sx = sx + csum
            xt = xt + hit
            m = m_new

    # logprobs = x - (m + log sexp), never materialized:
    # loss = conf*(lse - x_t) + smooth*(lse - mean(x)), conf + smooth = 1.
    lse = m + jnp.log(sexp)                                       # (TN, 1)
    loss = lse - confidence * xt - (smoothing / n_classes) * sx   # (TN, 1)

    # Mask padded rows (global row index >= true N).
    row = jax.lax.broadcasted_iota(jnp.int32, loss.shape, 0) + i * tile_n
    loss = jnp.where(row < n_valid, loss, 0.0)

    # Lane-dense per-tile partial sum (unmasked vst); wrapper reads lane 0.
    out_ref[...] = jnp.full((1, 128), jnp.sum(loss), dtype=jnp.float32)


def _class_chunks(c, max_chunk=1024):
    """Static (start, size) lane chunks over the class axis, 128-aligned starts."""
    if c <= max_chunk:
        return ((0, c),)
    return tuple((s, min(max_chunk, c - s)) for s in range(0, c, max_chunk))


def _choose_tile_n(n, c, itemsize):
    """Row tile: multiple of 8, native x block <= ~8 MiB, >=2 tiles if possible."""
    n_pad8 = ((n + 7) // 8) * 8
    budget = 8 * 1024 * 1024
    tn = budget // max(1, c * itemsize)
    tn = max(8, (int(tn) // 8) * 8)
    tn = min(tn, 1024, n_pad8)
    # Prefer >=2 grid tiles so ("parallel",) can shard across both v7x TCs.
    if n_pad8 >= 16 and tn >= n_pad8:
        tn = max(8, ((n_pad8 // 2) // 8) * 8)
    return tn


def label_smoothing_loss(x, target, smoothing=0.0):
    """x: (N, C) float logits (any float dtype); target: (N,) int labels.

    Returns scalar float32 loss = mean(conf*nll + smooth*(-mean logprobs)),
    matching the PyTorch LabelSmoothing.forward semantics.
    """
    n, c = x.shape
    tn = _choose_tile_n(n, c, jnp.dtype(x.dtype).itemsize)
    n_pad = ((n + tn - 1) // tn) * tn
    if n_pad != n:
        x = jnp.pad(x, ((0, n_pad - n), (0, 0)))
        target = jnp.pad(target, (0, n_pad - n))
    t2d = target.astype(jnp.int32).reshape(n_pad, 1)
    num_tiles = n_pad // tn

    kernel = functools.partial(
        _label_smoothing_kernel,
        confidence=1.0 - smoothing,
        smoothing=smoothing,
        n_valid=n,
        tile_n=tn,
        n_classes=c,
        chunks=_class_chunks(c),
    )

    partials = pl.pallas_call(
        kernel,
        out_shape=jax.ShapeDtypeStruct((1, num_tiles * 128), jnp.float32),
        grid=(num_tiles,),
        in_specs=[
            pl.BlockSpec((tn, c), lambda i: (i, 0)),   # x tile (native dtype)
            pl.BlockSpec((tn, 1), lambda i: (i, 0)),   # targets
        ],
        out_specs=pl.BlockSpec((1, 128), lambda i: (0, i)),
        compiler_params=pltpu.CompilerParams(
            dimension_semantics=("parallel",),
            vmem_limit_bytes=48 * 1024 * 1024,
        ),
    )(x, t2d)

    per_tile = partials.reshape(num_tiles, 128)[:, 0]
    return jnp.sum(per_tile) / jnp.float32(n)


def _reference(x, target, smoothing):
    logprobs = jax.nn.log_softmax(x.astype(jnp.float32), axis=-1)
    nll = -jnp.take_along_axis(logprobs, target[:, None], axis=-1)[:, 0]
    smooth = -jnp.mean(logprobs, axis=-1)
    return jnp.mean((1.0 - smoothing) * nll + smoothing * smooth)


if __name__ == "__main__":
    smoothing = 0.1

    # Test 1: tile-aligned shapes (single tile, single chunk).
    kx, kt = jax.random.split(jax.random.PRNGKey(0))
    N, C = 8, 32
    x = jax.random.normal(kx, (N, C), dtype=jnp.float32)
    target = jax.random.randint(kt, (N,), 0, C, dtype=jnp.int32)
    loss = jax.block_until_ready(label_smoothing_loss(x, target, smoothing))
    ref = _reference(x, target, smoothing)
    assert jnp.allclose(loss, ref, atol=1e-5, rtol=1e-5), (loss, ref)

    # Test 2: non-divisible N exercises padding + row-mask + 2 grid tiles.
    kx2, kt2 = jax.random.split(jax.random.PRNGKey(1))
    N2, C2 = 13, 40
    x2 = jax.random.normal(kx2, (N2, C2), dtype=jnp.float32)
    target2 = jax.random.randint(kt2, (N2,), 0, C2, dtype=jnp.int32)
    loss2 = jax.block_until_ready(label_smoothing_loss(x2, target2, smoothing))
    ref2 = _reference(x2, target2, smoothing)
    assert jnp.allclose(loss2, ref2, atol=1e-5, rtol=1e-5), (loss2, ref2)

    # Test 3: bf16 input + C > 1024 exercises the multi-chunk online-LSE path.
    kx3, kt3 = jax.random.split(jax.random.PRNGKey(2))
    N3, C3 = 16, 1536
    x3 = jax.random.normal(kx3, (N3, C3), dtype=jnp.float32).astype(jnp.bfloat16)
    target3 = jax.random.randint(kt3, (N3,), 0, C3, dtype=jnp.int32)
    loss3 = jax.block_until_ready(label_smoothing_loss(x3, target3, smoothing))
    ref3 = _reference(x3, target3, smoothing)
    assert jnp.allclose(loss3, ref3, atol=1e-4, rtol=1e-4), (loss3, ref3)

    print("KERNEL_OK")
</pallas_src>

<mosaic_0001>
module attributes {stable_mosaic.version = 11 : i64} {
  func.func @_label_smoothing_kernel(%arg0: i32, %arg1: memref<8x32xf32, #tpu.memory_space<vmem>>, %arg2: memref<8x1xi32, #tpu.memory_space<vmem>>, %arg3: memref<1x128xf32, #tpu.memory_space<vmem>>) attributes {dimension_semantics = [#tpu.dimension_semantics<parallel>], iteration_bounds = array<i64: 1>, scalar_prefetch = 0 : i64, scratch_operands = 0 : i64, tpu.core_type = #tpu.core_type<tc>, window_params = [{transform_indices = @transform_0, window_bounds = array<i64: 8, 32>}, {transform_indices = @transform_1, window_bounds = array<i64: 8, 1>}, {transform_indices = @transform_2, window_bounds = array<i64: 1, 128>}]} {
    %c0 = arith.constant 0 : index
    %c0_0 = arith.constant 0 : index
    %0 = vector.load %arg2[%c0, %c0_0] : memref<8x1xi32, #tpu.memory_space<vmem>>, vector<8x1xi32>
    %c0_1 = arith.constant 0 : index
    %c0_2 = arith.constant 0 : index
    %1 = vector.load %arg1[%c0_1, %c0_2] : memref<8x32xf32, #tpu.memory_space<vmem>>, vector<8x32xf32>
    %cst = arith.constant dense<0xFF800000> : vector<8xf32>
    %2 = vector.multi_reduction <maximumf>, %1, %cst [1] : vector<8x32xf32> to vector<8xf32>
    %3 = vector.shape_cast %2 : vector<8xf32> to vector<8x1xf32>
    %4 = tpu.iota {dimensions = array<i32: 1>} : vector<8x32xi32>
    %c0_i32 = arith.constant 0 : i32
    %5 = vector.broadcast %c0_i32 : i32 to vector<8x32xi32>
    %6 = arith.addi %4, %5 : vector<8x32xi32>
    %7 = vector.broadcast %0 : vector<8x1xi32> to vector<8x32xi32>
    %8 = arith.cmpi eq, %6, %7 : vector<8x32xi32>
    %cst_3 = arith.constant 0.000000e+00 : f32
    %9 = vector.broadcast %cst_3 : f32 to vector<8x32xf32>
    %10 = arith.select %8, %1, %9 : vector<8x32xi1>, vector<8x32xf32>
    %cst_4 = arith.constant dense<0.000000e+00> : vector<8xf32>
    %11 = vector.multi_reduction <add>, %10, %cst_4 [1] : vector<8x32xf32> to vector<8xf32>
    %12 = vector.shape_cast %11 : vector<8xf32> to vector<8x1xf32>
    %cst_5 = arith.constant dense<0.000000e+00> : vector<8xf32>
    %13 = vector.multi_reduction <add>, %1, %cst_5 [1] : vector<8x32xf32> to vector<8xf32>
    %14 = vector.shape_cast %13 : vector<8xf32> to vector<8x1xf32>
    %15 = vector.broadcast %3 : vector<8x1xf32> to vector<8x32xf32>
    %16 = arith.subf %1, %15 : vector<8x32xf32>
    %17 = math.exp %16 : vector<8x32xf32>
    %cst_6 = arith.constant dense<0.000000e+00> : vector<8xf32>
    %18 = vector.multi_reduction <add>, %17, %cst_6 [1] : vector<8x32xf32> to vector<8xf32>
    %19 = vector.shape_cast %18 : vector<8xf32> to vector<8x1xf32>
    %20 = math.log %19 : vector<8x1xf32>
    %21 = arith.addf %3, %20 : vector<8x1xf32>
    %cst_7 = arith.constant 0.899999976 : f32
    %22 = vector.broadcast %cst_7 : f32 to vector<8x1xf32>
    %23 = arith.mulf %22, %12 : vector<8x1xf32>
    %24 = arith.subf %21, %23 : vector<8x1xf32>
    %cst_8 = arith.constant 3.125000e-03 : f32
    %25 = vector.broadcast %cst_8 : f32 to vector<8x1xf32>
    %26 = arith.mulf %25, %14 : vector<8x1xf32>
    %27 = arith.subf %24, %26 : vector<8x1xf32>
    %28 = tpu.iota {dimensions = array<i32: 0>} : vector<8x1xi32>
    %c8_i32 = arith.constant 8 : i32
    %29 = arith.muli %arg0, %c8_i32 : i32
    %30 = vector.broadcast %29 : i32 to vector<8x1xi32>
    %31 = arith.addi %28, %30 : vector<8x1xi32>
    %c8_i32_9 = arith.constant 8 : i32
    %32 = vector.broadcast %c8_i32_9 : i32 to vector<8x1xi32>
    %33 = arith.cmpi slt, %31, %32 : vector<8x1xi32>
    %cst_10 = arith.constant 0.000000e+00 : f32
    %34 = vector.broadcast %cst_10 : f32 to vector<8x1xf32>
    %35 = arith.select %33, %27, %34 : vector<8x1xi1>, vector<8x1xf32>
    %36 = vector.shape_cast %35 : vector<8x1xf32> to vector<1x8x1xf32>
    %cst_11 = arith.constant dense<0.000000e+00> : vector<1xf32>
    %37 = vector.multi_reduction <add>, %36, %cst_11 [1, 2] : vector<1x8x1xf32> to vector<1xf32>
    %38 = vector.shape_cast %37 : vector<1xf32> to vector<1x1x1xf32>
    %39 = vector.extract %38[0, 0, 0] : f32 from vector<1x1x1xf32>
    %40 = vector.broadcast %39 : f32 to vector<1x128xf32>
    %c0_12 = arith.constant 0 : index
    %c0_13 = arith.constant 0 : index
    %41 = vector.load %arg3[%c0_12, %c0_13] : memref<1x128xf32, #tpu.memory_space<vmem>>, vector<1x128xf32>
    tpu.vector_store %arg3[%c0_12, %c0_13], %40 {strides = array<i32>} : memref<1x128xf32, #tpu.memory_space<vmem>>, vector<1x128xf32>,
    return
  }
  func.func @transform_0(%arg0: i32) -> (i32, i32) {
    %c0_i32 = arith.constant 0 : i32
    %c0_i32_0 = arith.constant 0 : i32
    return %arg0, %c0_i32 : i32, i32
  }
  func.func @transform_1(%arg0: i32) -> (i32, i32) {
    %c0_i32 = arith.constant 0 : i32
    %c0_i32_0 = arith.constant 0 : i32
    return %arg0, %c0_i32 : i32, i32
  }
  func.func @transform_2(%arg0: i32) -> (i32, i32) {
    %c0_i32 = arith.constant 0 : i32
    %c0_i32_0 = arith.constant 0 : i32
    return %c0_i32, %arg0 : i32, i32
  }
}

</mosaic_0001>

<llo_original>
// kernel: tpu_custom_call.1
$region0: #{tpu_custom_call.1}
  #allocation0 [shape = 'u32[]', space=smem, size = 0x4, offset = 0x4, fixed_abs, tag = 'smem constant byte address 0x4 - core index']
  #allocation1 [shape = 'u32[72,128]{1,0:T(1,128)}', space=vmem, size = 0x9000, scoped, tag = 'internal scratch']
  %s0 = inlined_call_operand.vmem [shape: f32[8,32], index: 0, kind: input, shape index: {}]
  %s1 = inlined_call_operand.vmem [shape: s32[8,1], index: 1, kind: input, shape index: {}]
  %s2 = inlined_call_operand.hbm [shape: f32[1,128], index: 2, kind: output, shape index: {}]
  %s3 = sld [smem:[#allocation0]]
  $region18: #{tpu_custom_call.1} parent=0
    _
  %s5 = ssub.s32 1, %s3
  %s6 = scalar_select 0, %s5, %s3
  $region1: #{tpu_custom_call.1} parent=0
    #allocation2 [shape = 'u8[512]{0}', space=vmem, size = 0x400, scoped, tag = 'output window, operand 0, single buffered']
    #allocation3 [shape = 's32[1]{0}', space=sflag, size = 0x4, scoped, tag = 'scoped memory for tpu_custom_call.1']
    %7 = vsyncpa [#allocation3], 0
    // Predicated region
    $region2: #{tpu_custom_call.1} parent=1 // pred_check
      _
    $region3: #{tpu_custom_call.1} parent=1 // pred_check_branch
      %9 = sbr.rel (0) target = $region5
    $region4: #{tpu_custom_call.1} parent=1 // pred_region
      _
    $region5: #{tpu_custom_call.1} parent=1 // pred_fallthru
      _
    // Predicated region
    $region6: #{tpu_custom_call.1} parent=1 // pred_check
      _
    $region7: #{tpu_custom_call.1} parent=1 // pred_check_branch
      %11 = sbr.rel (0) target = $region9
    $region8: #{tpu_custom_call.1} parent=1 // pred_region
      _
    $region9: #{tpu_custom_call.1} parent=1 // pred_fallthru
      _
    %v12 = vld [vmem:[%s1] sm:$0xff]
    %v13 = vld [vmem:[%s0] sm:$0xff]
    %vm14 = vcmask 261120
    %v15 = vsel %vm14, %v13, -inf
    %16 = vmax.xlane.f32.xlu0 %v15
    %v17 = vpop.xlane.xlu0 %16
    %v18 = vlaneseq
    %v19 = vand.u32 %v18, 127
    %20 = vset.pattern.permute.xlu0 0
    %21 = vperm.xlu0 %20, %v12
    %v22 = vpop.permute.xlu0 %21
    %vm23 = vcmp.eq.s32.totalorder %v19, %v22
    %v24 = vsel %vm23, %v13, 0.0
    %v25 = vsel %vm14, %v24, 0.0
    %26 = vadd.xlane.f32.xlu0 %v25
    %v27 = vpop.xlane.xlu0 %26
    %v28 = vsel %vm14, %v13, 0.0
    %29 = vadd.xlane.f32.xlu0 %v28
    %v30 = vpop.xlane.xlu0 %29
    %v31 = vsub.f32 %v13, %v17
    %v32 = vmul.f32 %v31, 1.442695
    %v33 = vpow.pop %v32
    %v34 = vsel %vm14, %v33, 0.0
    %35 = vadd.xlane.f32.xlu0 %v34
    %v36 = vpop.xlane.xlu0 %35
    %v37 = vlog2.pop %v36
    %v38 = vmul.f32 %v37, 0.6931472
    %v39 = vadd.f32 %v17, %v38
    %v40 = vmul.f32 %v27, 0.9
    %v41 = vsub.f32 %v39, %v40
    %v42 = vmul.f32 %v30, 0.003125
    %v43 = vsub.f32 %v41, %v42
    %v44 = vlaneseq
    %v45 = vshrl.u32 %v44, 7
    %s46 = smul.u32 0, 8
    %v47 = vstv %s46
    %v48 = vadd.s32 %v45, %v47
    %vm49 = vcmp.lt.s32.totalorder %v48, 8
    %v50 = vsel %vm49, %v43, 0.0
    %vm51 = vcmask 7168
    %v52 = vsel %vm51, %v50, 0.0
    %53 = vadd.xlane.f32.xlu0 %v52
    %v54 = vpop.xlane.xlu0 %53
    %v55 = vrot.slane %v54, 4
    %v56 = vadd.f32 %v54, %v55
    %v57 = vrot.slane %v56, 2
    %v58 = vadd.f32 %v56, %v57
    %v59 = vrot.slane %v58, 1
    %v60 = vadd.f32 %v58, %v59
    %s61 = vtos %v60
    %v62 = vstv %s61
    %63 = vst [vmem:[#allocation2] sm:$0x1] %v62
    // Predicated region
    $region10: #{tpu_custom_call.1} parent=1 // pred_check
      _
    $region11: #{tpu_custom_call.1} parent=1 // pred_check_branch
      %65 = sbr.rel (0) target = $region13
    $region12: #{tpu_custom_call.1} parent=1 // pred_region
      %67 = vsyncadd [#allocation3], 0
      %s69 = sshll.u32 [#allocation2], 4
      %s70 = int_to_ptr.vmem [resolvable:$true] %s69
      %s71 = sshll.u32 %s2, 4
      %s72 = int_to_ptr.hbm [resolvable:$true] %s71
      %74 = dma.vmem_to_hbm [thread:$0]  %s70, 16, %s72, [#allocation3]
    $region13: #{tpu_custom_call.1} parent=1 // pred_fallthru
      _
    // Predicated region
    $region14: #{tpu_custom_call.1} parent=1 // pred_check
      _
    $region15: #{tpu_custom_call.1} parent=1 // pred_check_branch
      %76 = sbr.rel (0) target = $region17
    $region16: #{tpu_custom_call.1} parent=1 // pred_region
      %78 = dma.done [#allocation3], 16
    $region17: #{tpu_custom_call.1} parent=1 // pred_fallthru
      _
    %79 = vsyncpa [#allocation3], 1

</llo_original>
